<compile_context>
chip_gen: v7x
topology: tpu7x:2x2x1
jax: 0.10.0
libtpu: 0.0.40
codegen_flags: <defaults>
</compile_context>

<pallas_src>
import jax
import jax.numpy as jnp
from jax import lax
from jax.experimental import pallas as pl
from jax.experimental.pallas import tpu as pltpu


# ---------------------------------------------------------------------------
# Helpers
# ---------------------------------------------------------------------------
def _round_up(x, m):
    return ((x + m - 1) // m) * m


def _num_tensorcores():
    """Defensive TensorCore count (2 on v7x, 1 on v5e/v6e); 1 if unknown."""
    try:
        info = pltpu.get_tpu_info()
        for name in ("num_cores", "num_tensorcores", "tensor_cores_per_chip",
                     "cores_per_chip"):
            v = getattr(info, name, None)
            if isinstance(v, int) and v > 0:
                return v
    except Exception:
        pass
    try:
        v = getattr(jax.devices()[0], "num_cores", None)
        if isinstance(v, int) and v > 0:
            return v
    except Exception:
        pass
    return 1


def _pick_tb(B, bytes_per_row, *, tb_max, vmem_budget, min_steps):
    """Largest power-of-two, multiple-of-128 batch tile that fits the VMEM
    budget, is not pointlessly larger than the padded batch, and (only on
    multi-TC chips) leaves >= min_steps grid steps for megacore sharding."""
    tb = tb_max
    while tb > 128 and tb * bytes_per_row > vmem_budget:
        tb //= 2
    while tb > 128 and tb // 2 >= _round_up(max(B, 1), 128):
        tb //= 2
    while tb > 128 and pl.cdiv(max(B, 1), tb) < min_steps:
        tb //= 2
    return max(tb, 128)


# ---------------------------------------------------------------------------
# Kernels
# ---------------------------------------------------------------------------
def _gather_t(tab, idx):
    """Gather columns of `tab` (K, R) at lane indices `idx` (1, T) via a 0/1
    one-hot matmul on the MXU -> (K, T) float32.

    Each output element has exactly one nonzero product (weight 1.0), so the
    bf16 matmul accumulation is exact; f32 tables use a hi/lo bf16 split so
    the gathered values are exact to ~2^-17 relative."""
    R, T = tab.shape[1], idx.shape[-1]
    rows = lax.broadcasted_iota(jnp.int32, (R, T), 0)
    sel = rows == idx                                              # (R, T) bool
    if tab.dtype == jnp.float32:
        oh = sel.astype(jnp.bfloat16)
        hi = tab.astype(jnp.bfloat16)
        lo = (tab - hi.astype(jnp.float32)).astype(jnp.bfloat16)
        return (jnp.dot(hi, oh, preferred_element_type=jnp.float32)
                + jnp.dot(lo, oh, preferred_element_type=jnp.float32))
    oh = sel.astype(tab.dtype)
    return jnp.dot(tab, oh, preferred_element_type=jnp.float32)


def _fused_kernel(mt_ref, ut_ref, et_ref, mi_ref, ui_ref, ei_ref, w_ref, out_ref):
    """Tables resident in VMEM; in-kernel gather + dot + blend.
    pred = w * <M[m], U[ou]> + (1 - w) * <M[m], E[oe]>  (exact for any w)."""
    w = w_ref[...].astype(jnp.float32)                              # (1, tb)
    gm = _gather_t(mt_ref[...], mi_ref[...])                        # (K, tb) f32
    du = jnp.sum(gm * _gather_t(ut_ref[...], ui_ref[...]), axis=0, keepdims=True)
    de = jnp.sum(gm * _gather_t(et_ref[...], ei_ref[...]), axis=0, keepdims=True)
    out_ref[...] = w * du + (1.0 - w) * de                          # (1, tb) lane-dense


def _stream_dot_kernel(mT_ref, oT_ref, out_ref):
    """pred = sum_k m[k, :] * other[k, :]; streams arrive transposed (K, tb),
    so every lane is used and the output is a lane-dense (1, tb) row."""
    prod = mT_ref[...].astype(jnp.float32) * oT_ref[...].astype(jnp.float32)
    out_ref[...] = jnp.sum(prod, axis=0, keepdims=True)


def _stream_blend_kernel(mT_ref, uT_ref, eT_ref, w_ref, out_ref):
    """Exact blend for fractional is_user: two dots + scalar blend with a
    lane-dense weight row (no third blended (K, tb) stream of vmuls)."""
    m = mT_ref[...].astype(jnp.float32)
    w = w_ref[...].astype(jnp.float32)
    du = jnp.sum(m * uT_ref[...].astype(jnp.float32), axis=0, keepdims=True)
    de = jnp.sum(m * eT_ref[...].astype(jnp.float32), axis=0, keepdims=True)
    out_ref[...] = w * du + (1.0 - w) * de


# ---------------------------------------------------------------------------
# Forward pass
# ---------------------------------------------------------------------------
def joint_movie_mf_forward(params, o, m, is_user, *, tb=None, exact_blend=False,
                           fused_rows_max=4096):
    """Pallas forward pass for JointMovieMF.

    o, m        : int (B,) ids (the module's modulo is applied here).
    is_user     : (B,) or (B, 1) blend weight; {0, 1} in the module's intended
                  use, but the fused path (and exact_blend=True) is exact for
                  fractional values too.
    fused_rows_max : if the three 128-padded tables together have at most this
                  many rows, they are kept resident in VMEM and gathered
                  in-kernel (no HBM round-trip of gathered embeddings);
                  otherwise the streaming fallback is used.
    exact_blend : streaming fallback only.  False folds a *boolean* is_user
                  into a single [U; E] gather (2 streams, least HBM traffic;
                  is_user > 0.5 counts as "user").  True keeps the exact
                  arithmetic blend via two dots.
    """
    U, M, E = params["U"], params["M"], params["E"]
    n_users, n_movies, n_entities = U.shape[0], M.shape[0], E.shape[0]
    K = M.shape[1]
    B = int(o.shape[0])
    t_dtype = M.dtype
    it = jnp.dtype(t_dtype).itemsize

    o = o.astype(jnp.int32)
    m = m.astype(jnp.int32)
    w = jnp.asarray(is_user).reshape(B).astype(jnp.float32)
    ou = o % n_users
    oe = o % n_entities

    Rpm = _round_up(n_movies, 128)
    Rpu = _round_up(n_users, 128)
    Rpe = _round_up(n_entities, 128)
    use_fused = (Rpm + Rpu + Rpe) <= fused_rows_max

    cores = _num_tensorcores()
    min_steps = 4 if cores > 1 else 1        # throttle tiles only on multi-TC chips
    vmem_budget = 16 << 20                   # conservative: fits every generation

    compiler_params = pltpu.CompilerParams(
        dimension_semantics=("parallel",),
        vmem_limit_bytes=32 * 1024 * 1024)

    if use_fused:
        # Per-lane VMEM bytes: one-hot intermediates + gathered rows + the
        # double-buffered index / weight / output blocks.
        bytes_per_row = ((Rpm + Rpu + Rpe) * max(it, 2) + 3 * K * 4
                         + 2 * (3 * 4 + 4 + 4))
        if tb is None:
            tb = _pick_tb(B, bytes_per_row, tb_max=2048,
                          vmem_budget=vmem_budget, min_steps=min_steps)
        tb = _round_up(tb, 128)
        grid = pl.cdiv(B, tb)
        Bp = grid * tb
        pad = Bp - B

        def row(v):                           # (B,) -> (1, Bp) lane-dense
            return jnp.pad(v, (0, pad)).reshape(1, Bp)

        def tab_t(tab, rp):                   # (R, K) -> (K, Rp), zero-padded cols
            t = tab.T
            return t if t.shape[1] == rp else jnp.pad(t, ((0, 0), (0, rp - t.shape[1])))

        MT, UT, ET = tab_t(M, Rpm), tab_t(U, Rpu), tab_t(E, Rpe)

        # Constant block index -> tables DMA'd once and kept VMEM-resident.
        tab_spec = lambda a: pl.BlockSpec(a.shape, lambda i: (0, 0))
        vec_spec = pl.BlockSpec((1, tb), lambda i: (0, i))

        out = pl.pallas_call(
            _fused_kernel,
            out_shape=jax.ShapeDtypeStruct((1, Bp), jnp.float32),
            grid_spec=pltpu.PrefetchScalarGridSpec(
                num_scalar_prefetch=0,
                grid=(grid,),
                in_specs=[tab_spec(MT), tab_spec(UT), tab_spec(ET),
                          vec_spec, vec_spec, vec_spec, vec_spec],
                out_specs=vec_spec),
            compiler_params=compiler_params,
            cost_estimate=pl.CostEstimate(
                flops=4 * Bp * K * (Rpm + Rpu + Rpe) + 6 * Bp * K,
                transcendentals=0,
                bytes_accessed=(MT.size + UT.size + ET.size) * it
                               + Bp * (3 * 4 + 4 + 4)),
        )(MT, UT, ET, row(m), row(ou), row(oe), row(w))
        return out.reshape(Bp)[:B]

    # ---------------- Streaming fallback (large tables) ----------------
    n_streams = 3 if exact_blend else 2
    bytes_per_row = 2 * n_streams * K * it + 2 * (4 + 4)   # dbl-buffered streams
    if tb is None:
        tb = _pick_tb(B, bytes_per_row, tb_max=8192,
                      vmem_budget=vmem_budget, min_steps=min_steps)
    tb = _round_up(tb, 128)
    grid = pl.cdiv(B, tb)
    Bp = grid * tb
    pad = Bp - B
    padded = lambda v: jnp.pad(v, (0, pad))

    # Gathered streams are presented transposed (K, Bp): full vreg lanes at any
    # K and a naturally lane-dense (1, tb) output block.
    # TODO(synk): a fused double-buffered row-DMA gather would also remove this
    # path's HBM round-trip of the gathered streams for very large tables.
    mT = jnp.take(M, padded(m), axis=0).T                               # (K, Bp)
    stream_spec = pl.BlockSpec((K, tb), lambda i: (0, i))
    vec_spec = pl.BlockSpec((1, tb), lambda i: (0, i))
    w_row = padded(w).reshape(1, Bp)

    if exact_blend:
        uT = jnp.take(U, padded(ou), axis=0).T
        eT = jnp.take(E, padded(oe), axis=0).T
        kernel, args = _stream_blend_kernel, (mT, uT, eT, w_row)
        in_specs = [stream_spec, stream_spec, stream_spec, vec_spec]
        flops = 4 * Bp * K + 3 * Bp
        bytes_accessed = 3 * Bp * K * it + Bp * 8
    else:
        # Boolean fast path: fold is_user into one gather against [U; E].
        # NOTE: params["UE"] (if present) must be rebuilt whenever U/E change.
        UE = params.get("UE")
        if UE is None:
            UE = jnp.concatenate([U, E], axis=0)
        oi = jnp.where(w > 0.5, ou, n_users + oe)
        oT = jnp.take(UE, padded(oi), axis=0).T
        kernel, args = _stream_dot_kernel, (mT, oT)
        in_specs = [stream_spec, stream_spec]
        flops = 2 * Bp * K
        bytes_accessed = 2 * Bp * K * it + Bp * 4

    out = pl.pallas_call(
        kernel,
        out_shape=jax.ShapeDtypeStruct((1, Bp), jnp.float32),
        grid_spec=pltpu.PrefetchScalarGridSpec(
            num_scalar_prefetch=0,
            grid=(grid,),
            in_specs=in_specs,
            out_specs=vec_spec),
        compiler_params=compiler_params,
        cost_estimate=pl.CostEstimate(
            flops=flops, transcendentals=0, bytes_accessed=bytes_accessed),
    )(*args)
    return out.reshape(Bp)[:B]


def init_params(key, n_users, n_movies, n_entities, k, dtype=jnp.float32):
    """nn.Embedding default init: N(0, 1).  dtype=bf16 halves the dominant HBM
    stream traffic; kernels upcast and accumulate in f32."""
    ku, km, ke = jax.random.split(key, 3)
    U = jax.random.normal(ku, (n_users, k)).astype(dtype)
    M = jax.random.normal(km, (n_movies, k)).astype(dtype)
    E = jax.random.normal(ke, (n_entities, k)).astype(dtype)
    # Optional pre-concatenated [U; E] for the streaming boolean fast path
    # (one "other" gather).  Rebuild whenever U/E are updated.
    return {"U": U, "M": M, "E": E, "UE": jnp.concatenate([U, E], axis=0)}


if __name__ == "__main__":
    n_users, n_movies, n_entities, k = 50, 40, 30, 32
    B = 200   # deliberately not a multiple of 128 -> exercises index padding

    root = jax.random.PRNGKey(0)
    kp, ko, km_, ku_, kw_ = jax.random.split(root, 5)
    params = init_params(kp, n_users, n_movies, n_entities, k)

    # "other" ids may be arbitrary ints (the module applies the modulo itself).
    o = jax.random.randint(ko, (B,), 0, max(n_users, n_entities) * 3,
                           dtype=jnp.int32)
    m = jax.random.randint(km_, (B,), 0, n_movies, dtype=jnp.int32)
    is_user = jax.random.bernoulli(ku_, 0.5, (B,)).astype(jnp.float32)
    w_frac = jax.random.uniform(kw_, (B,), dtype=jnp.float32)

    def reference(o_, m_, w_):
        other = (params["U"][o_ % n_users] * w_[:, None]
                 + params["E"][o_ % n_entities] * (1.0 - w_[:, None]))
        return jnp.sum(params["M"][m_] * other, axis=1)

    # 1) Default path: fused in-kernel gather, VMEM-resident tables.
    p1 = jax.block_until_ready(joint_movie_mf_forward(params, o, m, is_user))
    assert p1.shape == (B,)
    assert jnp.allclose(p1, reference(o, m, is_user), atol=1e-3, rtol=1e-3)

    # Fused path is exact for fractional is_user as well.
    p2 = jax.block_until_ready(joint_movie_mf_forward(params, o, m, w_frac))
    assert jnp.allclose(p2, reference(o, m, w_frac), atol=1e-3, rtol=1e-3)

    # 2) Streaming fallback (forced): boolean is_user folded into [U; E] gather.
    p3 = jax.block_until_ready(
        joint_movie_mf_forward(params, o, m, is_user, fused_rows_max=0))
    assert jnp.allclose(p3, reference(o, m, is_user), atol=1e-4, rtol=1e-4)

    # 3) Streaming fallback, exact arithmetic blend with fractional weights.
    p4 = jax.block_until_ready(
        joint_movie_mf_forward(params, o, m, w_frac,
                               fused_rows_max=0, exact_blend=True))
    assert jnp.allclose(p4, reference(o, m, w_frac), atol=1e-4, rtol=1e-4)

    print("KERNEL_OK")
</pallas_src>

<mosaic_0001>
module attributes {stable_mosaic.version = 11 : i64} {
  func.func @_fused_kernel(%arg0: i32, %arg1: memref<32x128xf32, #tpu.memory_space<vmem>>, %arg2: memref<32x128xf32, #tpu.memory_space<vmem>>, %arg3: memref<32x128xf32, #tpu.memory_space<vmem>>, %arg4: memref<1x256xi32, #tpu.memory_space<vmem>>, %arg5: memref<1x256xi32, #tpu.memory_space<vmem>>, %arg6: memref<1x256xi32, #tpu.memory_space<vmem>>, %arg7: memref<1x256xf32, #tpu.memory_space<vmem>>, %arg8: memref<1x256xf32, #tpu.memory_space<vmem>>) attributes {dimension_semantics = [#tpu.dimension_semantics<parallel>], iteration_bounds = array<i64: 1>, scalar_prefetch = 0 : i64, scratch_operands = 0 : i64, tpu.core_type = #tpu.core_type<tc>, window_params = [{pipeline_mode = #tpu.pipeline_mode<synchronous>, transform_indices = @transform_0, window_bounds = array<i64: 32, 128>}, {pipeline_mode = #tpu.pipeline_mode<synchronous>, transform_indices = @transform_1, window_bounds = array<i64: 32, 128>}, {pipeline_mode = #tpu.pipeline_mode<synchronous>, transform_indices = @transform_2, window_bounds = array<i64: 32, 128>}, {transform_indices = @transform_3, window_bounds = array<i64: 1, 256>}, {transform_indices = @transform_4, window_bounds = array<i64: 1, 256>}, {transform_indices = @transform_5, window_bounds = array<i64: 1, 256>}, {transform_indices = @transform_6, window_bounds = array<i64: 1, 256>}, {transform_indices = @transform_7, window_bounds = array<i64: 1, 256>}]} {
    %c0 = arith.constant 0 : index
    %c0_0 = arith.constant 0 : index
    %0 = vector.load %arg7[%c0, %c0_0] : memref<1x256xf32, #tpu.memory_space<vmem>>, vector<1x256xf32>
    %c0_1 = arith.constant 0 : index
    %c0_2 = arith.constant 0 : index
    %1 = vector.load %arg1[%c0_1, %c0_2] : memref<32x128xf32, #tpu.memory_space<vmem>>, vector<32x128xf32>
    %c0_3 = arith.constant 0 : index
    %c0_4 = arith.constant 0 : index
    %2 = vector.load %arg4[%c0_3, %c0_4] : memref<1x256xi32, #tpu.memory_space<vmem>>, vector<1x256xi32>
    %3 = tpu.iota {dimensions = array<i32: 0>} : vector<128x256xi32>
    %4 = vector.broadcast %2 : vector<1x256xi32> to vector<128x256xi32>
    %5 = arith.cmpi eq, %3, %4 : vector<128x256xi32>
    %6 = arith.extui %5 : vector<128x256xi1> to vector<128x256xi32>
    %7 = arith.sitofp %6 : vector<128x256xi32> to vector<128x256xf32>
    %8 = arith.truncf %7 : vector<128x256xf32> to vector<128x256xbf16>
    %9 = arith.truncf %1 : vector<32x128xf32> to vector<32x128xbf16>
    %10 = arith.extf %9 : vector<32x128xbf16> to vector<32x128xf32>
    %11 = arith.subf %1, %10 : vector<32x128xf32>
    %12 = arith.truncf %11 : vector<32x128xf32> to vector<32x128xbf16>
    %cst = arith.constant dense<0.000000e+00> : vector<32x256xf32>
    %13 = tpu.matmul %9, %8, %cst {dimension_numbers = #tpu.dot_dimension_numbers<[1], [0], [0], [1], [0, 0, 1, 1], [], []>} : vector<32x128xbf16>, vector<128x256xbf16>, vector<32x256xf32> -> vector<32x256xf32>
    %cst_5 = arith.constant dense<0.000000e+00> : vector<32x256xf32>
    %14 = tpu.matmul %12, %8, %cst_5 {dimension_numbers = #tpu.dot_dimension_numbers<[1], [0], [0], [1], [0, 0, 1, 1], [], []>} : vector<32x128xbf16>, vector<128x256xbf16>, vector<32x256xf32> -> vector<32x256xf32>
    %15 = arith.addf %13, %14 : vector<32x256xf32>
    %c0_6 = arith.constant 0 : index
    %c0_7 = arith.constant 0 : index
    %16 = vector.load %arg2[%c0_6, %c0_7] : memref<32x128xf32, #tpu.memory_space<vmem>>, vector<32x128xf32>
    %c0_8 = arith.constant 0 : index
    %c0_9 = arith.constant 0 : index
    %17 = vector.load %arg5[%c0_8, %c0_9] : memref<1x256xi32, #tpu.memory_space<vmem>>, vector<1x256xi32>
    %18 = tpu.iota {dimensions = array<i32: 0>} : vector<128x256xi32>
    %19 = vector.broadcast %17 : vector<1x256xi32> to vector<128x256xi32>
    %20 = arith.cmpi eq, %18, %19 : vector<128x256xi32>
    %21 = arith.extui %20 : vector<128x256xi1> to vector<128x256xi32>
    %22 = arith.sitofp %21 : vector<128x256xi32> to vector<128x256xf32>
    %23 = arith.truncf %22 : vector<128x256xf32> to vector<128x256xbf16>
    %24 = arith.truncf %16 : vector<32x128xf32> to vector<32x128xbf16>
    %25 = arith.extf %24 : vector<32x128xbf16> to vector<32x128xf32>
    %26 = arith.subf %16, %25 : vector<32x128xf32>
    %27 = arith.truncf %26 : vector<32x128xf32> to vector<32x128xbf16>
    %cst_10 = arith.constant dense<0.000000e+00> : vector<32x256xf32>
    %28 = tpu.matmul %24, %23, %cst_10 {dimension_numbers = #tpu.dot_dimension_numbers<[1], [0], [0], [1], [0, 0, 1, 1], [], []>} : vector<32x128xbf16>, vector<128x256xbf16>, vector<32x256xf32> -> vector<32x256xf32>
    %cst_11 = arith.constant dense<0.000000e+00> : vector<32x256xf32>
    %29 = tpu.matmul %27, %23, %cst_11 {dimension_numbers = #tpu.dot_dimension_numbers<[1], [0], [0], [1], [0, 0, 1, 1], [], []>} : vector<32x128xbf16>, vector<128x256xbf16>, vector<32x256xf32> -> vector<32x256xf32>
    %30 = arith.addf %28, %29 : vector<32x256xf32>
    %31 = arith.mulf %15, %30 : vector<32x256xf32>
    %cst_12 = arith.constant dense<0.000000e+00> : vector<256xf32>
    %32 = vector.multi_reduction <add>, %31, %cst_12 [0] : vector<32x256xf32> to vector<256xf32>
    %33 = vector.shape_cast %32 : vector<256xf32> to vector<1x256xf32>
    %c0_13 = arith.constant 0 : index
    %c0_14 = arith.constant 0 : index
    %34 = vector.load %arg3[%c0_13, %c0_14] : memref<32x128xf32, #tpu.memory_space<vmem>>, vector<32x128xf32>
    %c0_15 = arith.constant 0 : index
    %c0_16 = arith.constant 0 : index
    %35 = vector.load %arg6[%c0_15, %c0_16] : memref<1x256xi32, #tpu.memory_space<vmem>>, vector<1x256xi32>
    %36 = tpu.iota {dimensions = array<i32: 0>} : vector<128x256xi32>
    %37 = vector.broadcast %35 : vector<1x256xi32> to vector<128x256xi32>
    %38 = arith.cmpi eq, %36, %37 : vector<128x256xi32>
    %39 = arith.extui %38 : vector<128x256xi1> to vector<128x256xi32>
    %40 = arith.sitofp %39 : vector<128x256xi32> to vector<128x256xf32>
    %41 = arith.truncf %40 : vector<128x256xf32> to vector<128x256xbf16>
    %42 = arith.truncf %34 : vector<32x128xf32> to vector<32x128xbf16>
    %43 = arith.extf %42 : vector<32x128xbf16> to vector<32x128xf32>
    %44 = arith.subf %34, %43 : vector<32x128xf32>
    %45 = arith.truncf %44 : vector<32x128xf32> to vector<32x128xbf16>
    %cst_17 = arith.constant dense<0.000000e+00> : vector<32x256xf32>
    %46 = tpu.matmul %42, %41, %cst_17 {dimension_numbers = #tpu.dot_dimension_numbers<[1], [0], [0], [1], [0, 0, 1, 1], [], []>} : vector<32x128xbf16>, vector<128x256xbf16>, vector<32x256xf32> -> vector<32x256xf32>
    %cst_18 = arith.constant dense<0.000000e+00> : vector<32x256xf32>
    %47 = tpu.matmul %45, %41, %cst_18 {dimension_numbers = #tpu.dot_dimension_numbers<[1], [0], [0], [1], [0, 0, 1, 1], [], []>} : vector<32x128xbf16>, vector<128x256xbf16>, vector<32x256xf32> -> vector<32x256xf32>
    %48 = arith.addf %46, %47 : vector<32x256xf32>
    %49 = arith.mulf %15, %48 : vector<32x256xf32>
    %cst_19 = arith.constant dense<0.000000e+00> : vector<256xf32>
    %50 = vector.multi_reduction <add>, %49, %cst_19 [0] : vector<32x256xf32> to vector<256xf32>
    %51 = vector.shape_cast %50 : vector<256xf32> to vector<1x256xf32>
    %52 = arith.mulf %0, %33 : vector<1x256xf32>
    %cst_20 = arith.constant 1.000000e+00 : f32
    %53 = vector.broadcast %cst_20 : f32 to vector<1x256xf32>
    %54 = arith.subf %53, %0 : vector<1x256xf32>
    %55 = arith.mulf %54, %51 : vector<1x256xf32>
    %56 = arith.addf %52, %55 : vector<1x256xf32>
    %c0_21 = arith.constant 0 : index
    %c0_22 = arith.constant 0 : index
    %57 = vector.load %arg8[%c0_21, %c0_22] : memref<1x256xf32, #tpu.memory_space<vmem>>, vector<1x256xf32>
    tpu.vector_store %arg8[%c0_21, %c0_22], %56 {strides = array<i32>} : memref<1x256xf32, #tpu.memory_space<vmem>>, vector<1x256xf32>,
    return
  }
  func.func @transform_0(%arg0: i32) -> (i32, i32) {
    %c0_i32 = arith.constant 0 : i32
    %c0_i32_0 = arith.constant 0 : i32
    %c0_i32_1 = arith.constant 0 : i32
    return %c0_i32, %c0_i32_0 : i32, i32
  }
  func.func @transform_1(%arg0: i32) -> (i32, i32) {
    %c0_i32 = arith.constant 0 : i32
    %c0_i32_0 = arith.constant 0 : i32
    %c0_i32_1 = arith.constant 0 : i32
    return %c0_i32, %c0_i32_0 : i32, i32
  }
  func.func @transform_2(%arg0: i32) -> (i32, i32) {
    %c0_i32 = arith.constant 0 : i32
    %c0_i32_0 = arith.constant 0 : i32
    %c0_i32_1 = arith.constant 0 : i32
    return %c0_i32, %c0_i32_0 : i32, i32
  }
  func.func @transform_3(%arg0: i32) -> (i32, i32) {
    %c0_i32 = arith.constant 0 : i32
    %c0_i32_0 = arith.constant 0 : i32
    return %c0_i32, %arg0 : i32, i32
  }
  func.func @transform_4(%arg0: i32) -> (i32, i32) {
    %c0_i32 = arith.constant 0 : i32
    %c0_i32_0 = arith.constant 0 : i32
    return %c0_i32, %arg0 : i32, i32
  }
  func.func @transform_5(%arg0: i32) -> (i32, i32) {
    %c0_i32 = arith.constant 0 : i32
    %c0_i32_0 = arith.constant 0 : i32
    return %c0_i32, %arg0 : i32, i32
  }
  func.func @transform_6(%arg0: i32) -> (i32, i32) {
    %c0_i32 = arith.constant 0 : i32
    %c0_i32_0 = arith.constant 0 : i32
    return %c0_i32, %arg0 : i32, i32
  }
  func.func @transform_7(%arg0: i32) -> (i32, i32) {
    %c0_i32 = arith.constant 0 : i32
    %c0_i32_0 = arith.constant 0 : i32
    return %c0_i32, %arg0 : i32, i32
  }
}

</mosaic_0001>

<llo_original>
// kernel: tpu_custom_call.1
$region0: #{tpu_custom_call.1}
  #allocation0 [shape = 'u32[]', space=smem, size = 0x4, offset = 0x4, fixed_abs, tag = 'smem constant byte address 0x4 - core index']
  #allocation1 [shape = 'u32[144,128]{1,0:T(1,128)}', space=vmem, size = 0x12000, scoped, tag = 'internal scratch']
  %s0 = inlined_call_operand.hbm [shape: f32[32,128], index: 0, kind: input, shape index: {}]
  %s1 = inlined_call_operand.hbm [shape: f32[32,128], index: 1, kind: input, shape index: {}]
  %s2 = inlined_call_operand.hbm [shape: f32[32,128], index: 2, kind: input, shape index: {}]
  %s3 = inlined_call_operand.vmem [shape: s32[1,256], index: 3, kind: input, shape index: {}]
  %s4 = inlined_call_operand.vmem [shape: s32[1,256], index: 4, kind: input, shape index: {}]
  %s5 = inlined_call_operand.vmem [shape: s32[1,256], index: 5, kind: input, shape index: {}]
  %s6 = inlined_call_operand.vmem [shape: f32[1,256], index: 6, kind: input, shape index: {}]
  %s7 = inlined_call_operand.hbm [shape: f32[1,256], index: 7, kind: output, shape index: {}]
  %s8 = sld [smem:[#allocation0]]
  $region50: #{tpu_custom_call.1} parent=0
    _
  %s10 = ssub.s32 1, %s8
  %s11 = scalar_select 0, %s10, %s8
  $region1: #{tpu_custom_call.1} parent=0
    #allocation2 [shape = 'u8[16384]{0}', space=vmem, size = 0x4000, scoped, tag = 'input window, operand 0, single buffered']
    #allocation3 [shape = 's32[1]{0}', space=sflag, size = 0x4, scoped, tag = 'scoped memory for tpu_custom_call.1']
    #allocation4 [shape = 's32[1]{0}', space=sflag, size = 0x4, scoped, tag = 'scoped memory for tpu_custom_call.1']
    #allocation5 [shape = 'u8[16384]{0}', space=vmem, size = 0x4000, scoped, tag = 'input window, operand 1, single buffered']
    #allocation6 [shape = 's32[1]{0}', space=sflag, size = 0x4, scoped, tag = 'scoped memory for tpu_custom_call.1']
    #allocation7 [shape = 'u8[16384]{0}', space=vmem, size = 0x4000, scoped, tag = 'input window, operand 2, single buffered']
    #allocation8 [shape = 'u8[1024]{0}', space=vmem, size = 0x400, scoped, tag = 'output window, operand 0, single buffered']
    %12 = vsyncpa [#allocation3], 0
    %13 = vsyncpa [#allocation6], 0
    %14 = vsyncpa [#allocation4], 0
    // Predicated region
    $region2: #{tpu_custom_call.1} parent=1 // pred_check
      _
    $region3: #{tpu_custom_call.1} parent=1 // pred_check_branch
      %16 = sbr.rel (0) target = $region5
    $region4: #{tpu_custom_call.1} parent=1 // pred_region
      %s18 = ssub.s32 512, 512
      %19 = vsyncadd [#allocation3], %s18
      %s20 = sshll.u32 [#allocation2], 4
      %s21 = int_to_ptr.vmem [resolvable:$true] %s20
      %26 = dma.hbm_to_vmem [thread:$0]  %s0, 512, %s21, [#allocation3], 128, 128, 8
    $region5: #{tpu_custom_call.1} parent=1 // pred_fallthru
      _
    // Predicated region
    $region6: #{tpu_custom_call.1} parent=1 // pred_check
      _
    $region7: #{tpu_custom_call.1} parent=1 // pred_check_branch
      %28 = sbr.rel (0) target = $region9
    $region8: #{tpu_custom_call.1} parent=1 // pred_region
      %s30 = ssub.s32 512, 512
      %31 = vsyncadd [#allocation6], %s30
      %s32 = sshll.u32 [#allocation5], 4
      %s33 = int_to_ptr.vmem [resolvable:$true] %s32
      %38 = dma.hbm_to_vmem [thread:$0]  %s1, 512, %s33, [#allocation6], 128, 128, 8
    $region9: #{tpu_custom_call.1} parent=1 // pred_fallthru
      _
    // Predicated region
    $region10: #{tpu_custom_call.1} parent=1 // pred_check
      _
    $region11: #{tpu_custom_call.1} parent=1 // pred_check_branch
      %40 = sbr.rel (0) target = $region13
    $region12: #{tpu_custom_call.1} parent=1 // pred_region
      %s42 = ssub.s32 512, 512
      %43 = vsyncadd [#allocation6], %s42
      %s44 = sshll.u32 [#allocation7], 4
      %s45 = int_to_ptr.vmem [resolvable:$true] %s44
      %50 = dma.hbm_to_vmem [thread:$0]  %s2, 512, %s45, [#allocation6], 128, 128, 8
    $region13: #{tpu_custom_call.1} parent=1 // pred_fallthru
      _
    // Predicated region
    $region14: #{tpu_custom_call.1} parent=1 // pred_check
      _
    $region15: #{tpu_custom_call.1} parent=1 // pred_check_branch
      %52 = sbr.rel (0) target = $region17
    $region16: #{tpu_custom_call.1} parent=1 // pred_region
      _
    $region17: #{tpu_custom_call.1} parent=1 // pred_fallthru
      _
    // Predicated region
    $region18: #{tpu_custom_call.1} parent=1 // pred_check
      _
    $region19: #{tpu_custom_call.1} parent=1 // pred_check_branch
      %54 = sbr.rel (0) target = $region21
    $region20: #{tpu_custom_call.1} parent=1 // pred_region
      _
    $region21: #{tpu_custom_call.1} parent=1 // pred_fallthru
      _
    // Predicated region
    $region22: #{tpu_custom_call.1} parent=1 // pred_check
      _
    $region23: #{tpu_custom_call.1} parent=1 // pred_check_branch
      %56 = sbr.rel (0) target = $region25
    $region24: #{tpu_custom_call.1} parent=1 // pred_region
      _
    $region25: #{tpu_custom_call.1} parent=1 // pred_fallthru
      _
    // Predicated region
    $region26: #{tpu_custom_call.1} parent=1 // pred_check
      _
    $region27: #{tpu_custom_call.1} parent=1 // pred_check_branch
      %58 = sbr.rel (0) target = $region29
    $region28: #{tpu_custom_call.1} parent=1 // pred_region
      _
    $region29: #{tpu_custom_call.1} parent=1 // pred_fallthru
      _
    // Predicated region
    $region30: #{tpu_custom_call.1} parent=1 // pred_check
      _
    $region31: #{tpu_custom_call.1} parent=1 // pred_check_branch
      %60 = sbr.rel (0) target = $region33
    $region32: #{tpu_custom_call.1} parent=1 // pred_region
      %61 = dma.done [#allocation3], 512
    $region33: #{tpu_custom_call.1} parent=1 // pred_fallthru
      _
    // Predicated region
    $region34: #{tpu_custom_call.1} parent=1 // pred_check
      _
    $region35: #{tpu_custom_call.1} parent=1 // pred_check_branch
      %63 = sbr.rel (0) target = $region37
    $region36: #{tpu_custom_call.1} parent=1 // pred_region
      %64 = dma.done [#allocation6], 512
    $region37: #{tpu_custom_call.1} parent=1 // pred_fallthru
      _
    // Predicated region
    $region38: #{tpu_custom_call.1} parent=1 // pred_check
      _
    $region39: #{tpu_custom_call.1} parent=1 // pred_check_branch
      %66 = sbr.rel (0) target = $region41
    $region40: #{tpu_custom_call.1} parent=1 // pred_region
      %67 = dma.done [#allocation6], 512
    $region41: #{tpu_custom_call.1} parent=1 // pred_fallthru
      _
    %v69 = vld [vmem:[%s6] sm:$0x3]
    %v70 = vld [vmem:[#allocation2] sm:$0xff]
    %v71 = vld [vmem:[#allocation2 + $0x8] sm:$0xff]
    %v72 = vld [vmem:[#allocation2 + $0x10] sm:$0xff]
    %v73 = vld [vmem:[#allocation2 + $0x18] sm:$0xff]
    %v74 = vld [vmem:[%s3] sm:$0x3]
    %v75 = vlaneseq
    %v76 = vshrl.u32 %v75, 7
    %v77 = vadd.s32 %v76, 8
    %v78 = vadd.s32 %v76, 16
    %v79 = vadd.s32 %v76, 24
    %v80 = vadd.s32 %v76, 32
    %v81 = vadd.s32 %v76, 40
    %v82 = vadd.s32 %v76, 48
    %v83 = vadd.s32 %v76, 56
    %v84 = vadd.s32 %v76, 64
    %v85 = vadd.s32 %v76, 72
    %v86 = vadd.s32 %v76, 80
    %v87 = vadd.s32 %v76, 88
    %v88 = vadd.s32 %v76, 96
    %v89 = vadd.s32 %v76, 104
    %v90 = vadd.s32 %v76, 112
    %v91 = vadd.s32 %v76, 120
    %v92 = vlaneseq
    %v93 = vshrl.u32 %v92, 7
    %v94 = vsub.s32 0, %v93
    %v95 = vrot.slane %v74, %v94
    %v96 = vlaneseq
    %v97 = vshrl.u32 %v96, 7
    %v98 = vsub.s32 1, %v97
    %v99 = vrot.slane %v74, %v98
    %vm100 = vcmp.eq.s32.totalorder %v76, %v95
    %vm101 = vcmp.eq.s32.totalorder %v76, %v99
    %vm102 = vcmp.eq.s32.totalorder %v77, %v95
    %vm103 = vcmp.eq.s32.totalorder %v77, %v99
    %vm104 = vcmp.eq.s32.totalorder %v78, %v95
    %vm105 = vcmp.eq.s32.totalorder %v78, %v99
    %vm106 = vcmp.eq.s32.totalorder %v79, %v95
    %vm107 = vcmp.eq.s32.totalorder %v79, %v99
    %vm108 = vcmp.eq.s32.totalorder %v80, %v95
    %vm109 = vcmp.eq.s32.totalorder %v80, %v99
    %vm110 = vcmp.eq.s32.totalorder %v81, %v95
    %vm111 = vcmp.eq.s32.totalorder %v81, %v99
    %vm112 = vcmp.eq.s32.totalorder %v82, %v95
    %vm113 = vcmp.eq.s32.totalorder %v82, %v99
    %vm114 = vcmp.eq.s32.totalorder %v83, %v95
    %vm115 = vcmp.eq.s32.totalorder %v83, %v99
    %vm116 = vcmp.eq.s32.totalorder %v84, %v95
    %vm117 = vcmp.eq.s32.totalorder %v84, %v99
    %vm118 = vcmp.eq.s32.totalorder %v85, %v95
    %vm119 = vcmp.eq.s32.totalorder %v85, %v99
    %vm120 = vcmp.eq.s32.totalorder %v86, %v95
    %vm121 = vcmp.eq.s32.totalorder %v86, %v99
    %vm122 = vcmp.eq.s32.totalorder %v87, %v95
    %vm123 = vcmp.eq.s32.totalorder %v87, %v99
    %vm124 = vcmp.eq.s32.totalorder %v88, %v95
    %vm125 = vcmp.eq.s32.totalorder %v88, %v99
    %vm126 = vcmp.eq.s32.totalorder %v89, %v95
    %vm127 = vcmp.eq.s32.totalorder %v89, %v99
    %vm128 = vcmp.eq.s32.totalorder %v90, %v95
    %vm129 = vcmp.eq.s32.totalorder %v90, %v99
    %vm130 = vcmp.eq.s32.totalorder %v91, %v95
    %vm131 = vcmp.eq.s32.totalorder %v91, %v99
    %v132 = vsel %vm100, 1, 0
    %v133 = vsel %vm101, 1, 0
    %v134 = vsel %vm102, 1, 0
    %v135 = vsel %vm103, 1, 0
    %v136 = vsel %vm104, 1, 0
    %v137 = vsel %vm105, 1, 0
    %v138 = vsel %vm106, 1, 0
    %v139 = vsel %vm107, 1, 0
    %v140 = vsel %vm108, 1, 0
    %v141 = vsel %vm109, 1, 0
    %v142 = vsel %vm110, 1, 0
    %v143 = vsel %vm111, 1, 0
    %v144 = vsel %vm112, 1, 0
    %v145 = vsel %vm113, 1, 0
    %v146 = vsel %vm114, 1, 0
    %v147 = vsel %vm115, 1, 0
    %v148 = vsel %vm116, 1, 0
    %v149 = vsel %vm117, 1, 0
    %v150 = vsel %vm118, 1, 0
    %v151 = vsel %vm119, 1, 0
    %v152 = vsel %vm120, 1, 0
    %v153 = vsel %vm121, 1, 0
    %v154 = vsel %vm122, 1, 0
    %v155 = vsel %vm123, 1, 0
    %v156 = vsel %vm124, 1, 0
    %v157 = vsel %vm125, 1, 0
    %v158 = vsel %vm126, 1, 0
    %v159 = vsel %vm127, 1, 0
    %v160 = vsel %vm128, 1, 0
    %v161 = vsel %vm129, 1, 0
    %v162 = vsel %vm130, 1, 0
    %v163 = vsel %vm131, 1, 0
    %v164 = vcvt.s32.f32 %v132
    %v165 = vcvt.s32.f32 %v133
    %v166 = vcvt.s32.f32 %v134
    %v167 = vcvt.s32.f32 %v135
    %v168 = vcvt.s32.f32 %v136
    %v169 = vcvt.s32.f32 %v137
    %v170 = vcvt.s32.f32 %v138
    %v171 = vcvt.s32.f32 %v139
    %v172 = vcvt.s32.f32 %v140
    %v173 = vcvt.s32.f32 %v141
    %v174 = vcvt.s32.f32 %v142
    %v175 = vcvt.s32.f32 %v143
    %v176 = vcvt.s32.f32 %v144
    %v177 = vcvt.s32.f32 %v145
    %v178 = vcvt.s32.f32 %v146
    %v179 = vcvt.s32.f32 %v147
    %v180 = vcvt.s32.f32 %v148
    %v181 = vcvt.s32.f32 %v149
    %v182 = vcvt.s32.f32 %v150
    %v183 = vcvt.s32.f32 %v151
    %v184 = vcvt.s32.f32 %v152
    %v185 = vcvt.s32.f32 %v153
    %v186 = vcvt.s32.f32 %v154
    %v187 = vcvt.s32.f32 %v155
    %v188 = vcvt.s32.f32 %v156
    %v189 = vcvt.s32.f32 %v157
    %v190 = vcvt.s32.f32 %v158
    %v191 = vcvt.s32.f32 %v159
    %v192 = vcvt.s32.f32 %v160
    %v193 = vcvt.s32.f32 %v161
    %v194 = vcvt.s32.f32 %v162
    %v195 = vcvt.s32.f32 %v163
    %v196 = vpack.c.bf16 %v166, %v164
    %v197 = vpack.c.bf16 %v167, %v165
    %v198 = vpack.c.bf16 %v170, %v168
    %v199 = vpack.c.bf16 %v171, %v169
    %v200 = vpack.c.bf16 %v174, %v172
    %v201 = vpack.c.bf16 %v175, %v173
    %v202 = vpack.c.bf16 %v178, %v176
    %v203 = vpack.c.bf16 %v179, %v177
    %v204 = vpack.c.bf16 %v182, %v180
    %v205 = vpack.c.bf16 %v183, %v181
    %v206 = vpack.c.bf16 %v186, %v184
    %v207 = vpack.c.bf16 %v187, %v185
    %v208 = vpack.c.bf16 %v190, %v188
    %v209 = vpack.c.bf16 %v191, %v189
    %v210 = vpack.c.bf16 %v194, %v192
    %v211 = vpack.c.bf16 %v195, %v193
    %v212 = vpack.c.bf16 %v71, %v70
    %v213 = vpack.c.bf16 %v73, %v72
    %v214 = vunpack.c.l.bf16 %v212
    %v215 = vunpack.c.h.bf16 %v212
    %v216 = vunpack.c.l.bf16 %v213
    %v217 = vunpack.c.h.bf16 %v213
    %v218 = vsub.f32 %v70, %v214
    %v219 = vsub.f32 %v71, %v215
    %v220 = vsub.f32 %v72, %v216
    %v221 = vsub.f32 %v73, %v217
    %v222 = vpack.c.bf16 %v219, %v218
    %v223 = vpack.c.bf16 %v221, %v220
    %224 = vmatprep.subr.bf16.mxu0 %v197
    %225 = vmatpush1.bf16.msra.mxu0 %v196
    %226 = vmatprep.subr.bf16.mxu0 %v199
    %227 = vmatpush1.bf16.msra.mxu0 %v198
    %228 = vmatprep.subr.bf16.mxu0 %v201
    %229 = vmatpush1.bf16.msra.mxu0 %v200
    %230 = vmatprep.subr.bf16.mxu0 %v203
    %231 = vmatpush1.bf16.msra.mxu0 %v202
    %232 = vmatprep.subr.bf16.mxu0 %v205
    %233 = vmatpush1.bf16.msra.mxu0 %v204
    %234 = vmatprep.subr.bf16.mxu0 %v207
    %235 = vmatpush1.bf16.msra.mxu0 %v206
    %236 = vmatprep.subr.bf16.mxu0 %v209
    %237 = vmatpush1.bf16.msra.mxu0 %v208
    %238 = vmatprep.subr.bf16.mxu0 %v211
    %239 = vmatpush1.bf16.msra.mxu0 %v210
    %240 = vmatprep.subr.bf16.mxu0 0
    %241 = vmatpush1.bf16.msra.mxu0 0
    %242 = vmatprep.subr.bf16.mxu0 0
    %243 = vmatpush1.bf16.msra.mxu0 0
    %244 = vmatprep.subr.bf16.mxu0 0
    %245 = vmatpush1.bf16.msra.mxu0 0
    %246 = vmatprep.subr.bf16.mxu0 0
    %247 = vmatpush1.bf16.msra.mxu0 0
    %248 = vmatprep.subr.bf16.mxu0 0
    %249 = vmatpush1.bf16.msra.mxu0 0
    %250 = vmatprep.subr.bf16.mxu0 0
    %251 = vmatpush1.bf16.msra.mxu0 0
    %252 = vmatprep.subr.bf16.mxu0 0
    %253 = vmatpush1.bf16.msra.mxu0 0
    %254 = vmatprep.subr.bf16.mxu0 0
    %255 = vmatpush1.bf16.msra.mxu0 0
    %256 = vmatprep.mubr.bf16.mxu0 0
    %257 = vmatmul.mubr.bf16.gmra.mrb[0].mxu0 %v222
    %v258 = vpop.f32.mrb[0].mxu0
    %v259 = vadd.f32 0.0, %v258
    %v260 = vpop.f32.mrb[0].mxu0
    %v261 = vadd.f32 0.0, %v260
    %v262 = vpop.f32.mrb[0].mxu0
    %v263 = vadd.f32 0.0, %v262
    %v264 = vpop.f32.mrb[0].mxu0
    %v265 = vadd.f32 0.0, %v264
    %266 = vmatprep.mubr.bf16.mxu0 0
    %267 = vmatmul.mubr.bf16.gmra.mrb[0].mxu0 %v223
    %v268 = vpop.f32.mrb[0].mxu0
    %v269 = vadd.f32 0.0, %v268
    %v270 = vpop.f32.mrb[0].mxu0
    %v271 = vadd.f32 0.0, %v270
    %v272 = vpop.f32.mrb[0].mxu0
    %v273 = vadd.f32 0.0, %v272
    %v274 = vpop.f32.mrb[0].mxu0
    %v275 = vadd.f32 0.0, %v274
    %276 = vdwg.mxu0
    %277 = vmatprep.subr.bf16.mxu0 %v197
    %278 = vmatpush1.bf16.msra.mxu0 %v196
    %279 = vmatprep.subr.bf16.mxu0 %v199
    %280 = vmatpush1.bf16.msra.mxu0 %v198
    %281 = vmatprep.subr.bf16.mxu0 %v201
    %282 = vmatpush1.bf16.msra.mxu0 %v200
    %283 = vmatprep.subr.bf16.mxu0 %v203
    %284 = vmatpush1.bf16.msra.mxu0 %v202
    %285 = vmatprep.subr.bf16.mxu0 %v205
    %286 = vmatpush1.bf16.msra.mxu0 %v204
    %287 = vmatprep.subr.bf16.mxu0 %v207
    %288 = vmatpush1.bf16.msra.mxu0 %v206
    %289 = vmatprep.subr.bf16.mxu0 %v209
    %290 = vmatpush1.bf16.msra.mxu0 %v208
    %291 = vmatprep.subr.bf16.mxu0 %v211
    %292 = vmatpush1.bf16.msra.mxu0 %v210
    %293 = vmatprep.subr.bf16.mxu0 0
    %294 = vmatpush1.bf16.msra.mxu0 0
    %295 = vmatprep.subr.bf16.mxu0 0
    %296 = vmatpush1.bf16.msra.mxu0 0
    %297 = vmatprep.subr.bf16.mxu0 0
    %298 = vmatpush1.bf16.msra.mxu0 0
    %299 = vmatprep.subr.bf16.mxu0 0
    %300 = vmatpush1.bf16.msra.mxu0 0
    %301 = vmatprep.subr.bf16.mxu0 0
    %302 = vmatpush1.bf16.msra.mxu0 0
    %303 = vmatprep.subr.bf16.mxu0 0
    %304 = vmatpush1.bf16.msra.mxu0 0
    %305 = vmatprep.subr.bf16.mxu0 0
    %306 = vmatpush1.bf16.msra.mxu0 0
    %307 = vmatprep.subr.bf16.mxu0 0
    %308 = vmatpush1.bf16.msra.mxu0 0
    %309 = vmatprep.mubr.bf16.mxu0 0
    %310 = vmatmul.mubr.bf16.gmra.mrb[0].mxu0 %v212
    %v311 = vpop.f32.mrb[0].mxu0
    %v312 = vadd.f32 %v259, %v311
    %v313 = vpop.f32.mrb[0].mxu0
    %v314 = vadd.f32 %v261, %v313
    %v315 = vpop.f32.mrb[0].mxu0
    %v316 = vadd.f32 %v263, %v315
    %v317 = vpop.f32.mrb[0].mxu0
    %v318 = vadd.f32 %v265, %v317
    %319 = vmatprep.mubr.bf16.mxu0 0
    %320 = vmatmul.mubr.bf16.gmra.mrb[0].mxu0 %v213
    %v321 = vpop.f32.mrb[0].mxu0
    %v322 = vadd.f32 %v269, %v321
    %v323 = vpop.f32.mrb[0].mxu0
    %v324 = vadd.f32 %v271, %v323
    %v325 = vpop.f32.mrb[0].mxu0
    %v326 = vadd.f32 %v273, %v325
    %v327 = vpop.f32.mrb[0].mxu0
    %v328 = vadd.f32 %v275, %v327
    %329 = vdwg.mxu0
    %v330 = vld [vmem:[#allocation5] sm:$0xff]
    %v331 = vld [vmem:[#allocation5 + $0x8] sm:$0xff]
    %v332 = vld [vmem:[#allocation5 + $0x10] sm:$0xff]
    %v333 = vld [vmem:[#allocation5 + $0x18] sm:$0xff]
    %v334 = vld [vmem:[%s4] sm:$0x3]
    %v335 = vlaneseq
    %v336 = vshrl.u32 %v335, 7
    %v337 = vsub.s32 0, %v336
    %v338 = vrot.slane %v334, %v337
    %v339 = vlaneseq
    %v340 = vshrl.u32 %v339, 7
    %v341 = vsub.s32 1, %v340
    %v342 = vrot.slane %v334, %v341
    %vm343 = vcmp.eq.s32.totalorder %v76, %v338
    %vm344 = vcmp.eq.s32.totalorder %v76, %v342
    %vm345 = vcmp.eq.s32.totalorder %v77, %v338
    %vm346 = vcmp.eq.s32.totalorder %v77, %v342
    %vm347 = vcmp.eq.s32.totalorder %v78, %v338
    %vm348 = vcmp.eq.s32.totalorder %v78, %v342
    %vm349 = vcmp.eq.s32.totalorder %v79, %v338
    %vm350 = vcmp.eq.s32.totalorder %v79, %v342
    %vm351 = vcmp.eq.s32.totalorder %v80, %v338
    %vm352 = vcmp.eq.s32.totalorder %v80, %v342
    %vm353 = vcmp.eq.s32.totalorder %v81, %v338
    %vm354 = vcmp.eq.s32.totalorder %v81, %v342
    %vm355 = vcmp.eq.s32.totalorder %v82, %v338
    %vm356 = vcmp.eq.s32.totalorder %v82, %v342
    %vm357 = vcmp.eq.s32.totalorder %v83, %v338
    %vm358 = vcmp.eq.s32.totalorder %v83, %v342
    %vm359 = vcmp.eq.s32.totalorder %v84, %v338
    %vm360 = vcmp.eq.s32.totalorder %v84, %v342
    %vm361 = vcmp.eq.s32.totalorder %v85, %v338
    %vm362 = vcmp.eq.s32.totalorder %v85, %v342
    %vm363 = vcmp.eq.s32.totalorder %v86, %v338
    %vm364 = vcmp.eq.s32.totalorder %v86, %v342
    %vm365 = vcmp.eq.s32.totalorder %v87, %v338
    %vm366 = vcmp.eq.s32.totalorder %v87, %v342
    %vm367 = vcmp.eq.s32.totalorder %v88, %v338
    %vm368 = vcmp.eq.s32.totalorder %v88, %v342
    %vm369 = vcmp.eq.s32.totalorder %v89, %v338
    %vm370 = vcmp.eq.s32.totalorder %v89, %v342
    %vm371 = vcmp.eq.s32.totalorder %v90, %v338
    %vm372 = vcmp.eq.s32.totalorder %v90, %v342
    %vm373 = vcmp.eq.s32.totalorder %v91, %v338
    %vm374 = vcmp.eq.s32.totalorder %v91, %v342
    %v375 = vsel %vm343, 1, 0
    %v376 = vsel %vm344, 1, 0
    %v377 = vsel %vm345, 1, 0
    %v378 = vsel %vm346, 1, 0
    %v379 = vsel %vm347, 1, 0
    %v380 = vsel %vm348, 1, 0
    %v381 = vsel %vm349, 1, 0
    %v382 = vsel %vm350, 1, 0
    %v383 = vsel %vm351, 1, 0
    %v384 = vsel %vm352, 1, 0
    %v385 = vsel %vm353, 1, 0
    %v386 = vsel %vm354, 1, 0
    %v387 = vsel %vm355, 1, 0
    %v388 = vsel %vm356, 1, 0
    %v389 = vsel %vm357, 1, 0
    %v390 = vsel %vm358, 1, 0
    %v391 = vsel %vm359, 1, 0
    %v392 = vsel %vm360, 1, 0
    %v393 = vsel %vm361, 1, 0
    %v394 = vsel %vm362, 1, 0
    %v395 = vsel %vm363, 1, 0
    %v396 = vsel %vm364, 1, 0
    %v397 = vsel %vm365, 1, 0
    %v398 = vsel %vm366, 1, 0
    %v399 = vsel %vm367, 1, 0
    %v400 = vsel %vm368, 1, 0
    %v401 = vsel %vm369, 1, 0
    %v402 = vsel %vm370, 1, 0
    %v403 = vsel %vm371, 1, 0
    %v404 = vsel %vm372, 1, 0
    %v405 = vsel %vm373, 1, 0
    %v406 = vsel %vm374, 1, 0
    %v407 = vcvt.s32.f32 %v375
    %v408 = vcvt.s32.f32 %v376
    %v409 = vcvt.s32.f32 %v377
    %v410 = vcvt.s32.f32 %v378
    %v411 = vcvt.s32.f32 %v379
    %v412 = vcvt.s32.f32 %v380
    %v413 = vcvt.s32.f32 %v381
    %v414 = vcvt.s32.f32 %v382
    %v415 = vcvt.s32.f32 %v383
    %v416 = vcvt.s32.f32 %v384
    %v417 = vcvt.s32.f32 %v385
    %v418 = vcvt.s32.f32 %v386
    %v419 = vcvt.s32.f32 %v387
    %v420 = vcvt.s32.f32 %v388
    %v421 = vcvt.s32.f32 %v389
    %v422 = vcvt.s32.f32 %v390
    %v423 = vcvt.s32.f32 %v391
    %v424 = vcvt.s32.f32 %v392
    %v425 = vcvt.s32.f32 %v393
    %v426 = vcvt.s32.f32 %v394
    %v427 = vcvt.s32.f32 %v395
    %v428 = vcvt.s32.f32 %v396
    %v429 = vcvt.s32.f32 %v397
    %v430 = vcvt.s32.f32 %v398
    %v431 = vcvt.s32.f32 %v399
    %v432 = vcvt.s32.f32 %v400
    %v433 = vcvt.s32.f32 %v401
    %v434 = vcvt.s32.f32 %v402
    %v435 = vcvt.s32.f32 %v403
    %v436 = vcvt.s32.f32 %v404
    %v437 = vcvt.s32.f32 %v405
    %v438 = vcvt.s32.f32 %v406
    %v439 = vpack.c.bf16 %v409, %v407
    %v440 = vpack.c.bf16 %v410, %v408
    %v441 = vpack.c.bf16 %v413, %v411
    %v442 = vpack.c.bf16 %v414, %v412
    %v443 = vpack.c.bf16 %v417, %v415
    %v444 = vpack.c.bf16 %v418, %v416
    %v445 = vpack.c.bf16 %v421, %v419
    %v446 = vpack.c.bf16 %v422, %v420
    %v447 = vpack.c.bf16 %v425, %v423
    %v448 = vpack.c.bf16 %v426, %v424
    %v449 = vpack.c.bf16 %v429, %v427
    %v450 = vpack.c.bf16 %v430, %v428
    %v451 = vpack.c.bf16 %v433, %v431
    %v452 = vpack.c.bf16 %v434, %v432
    %v453 = vpack.c.bf16 %v437, %v435
    %v454 = vpack.c.bf16 %v438, %v436
    %v455 = vpack.c.bf16 %v331, %v330
    %v456 = vpack.c.bf16 %v333, %v332
    %v457 = vunpack.c.l.bf16 %v455
    %v458 = vunpack.c.h.bf16 %v455
    %v459 = vunpack.c.l.bf16 %v456
    %v460 = vunpack.c.h.bf16 %v456
    %v461 = vsub.f32 %v330, %v457
    %v462 = vsub.f32 %v331, %v458
    %v463 = vsub.f32 %v332, %v459
    %v464 = vsub.f32 %v333, %v460
    %v465 = vpack.c.bf16 %v462, %v461
    %v466 = vpack.c.bf16 %v464, %v463
    %467 = vmatprep.subr.bf16.mxu0 %v440
    %468 = vmatpush1.bf16.msra.mxu0 %v439
    %469 = vmatprep.subr.bf16.mxu0 %v442
    %470 = vmatpush1.bf16.msra.mxu0 %v441
    %471 = vmatprep.subr.bf16.mxu0 %v444
    %472 = vmatpush1.bf16.msra.mxu0 %v443
    %473 = vmatprep.subr.bf16.mxu0 %v446
    %474 = vmatpush1.bf16.msra.mxu0 %v445
    %475 = vmatprep.subr.bf16.mxu0 %v448
    %476 = vmatpush1.bf16.msra.mxu0 %v447
    %477 = vmatprep.subr.bf16.mxu0 %v450
    %478 = vmatpush1.bf16.msra.mxu0 %v449
    %479 = vmatprep.subr.bf16.mxu0 %v452
    %480 = vmatpush1.bf16.msra.mxu0 %v451
    %481 = vmatprep.subr.bf16.mxu0 %v454
    %482 = vmatpush1.bf16.msra.mxu0 %v453
    %483 = vmatprep.subr.bf16.mxu0 0
    %484 = vmatpush1.bf16.msra.mxu0 0
    %485 = vmatprep.subr.bf16.mxu0 0
    %486 = vmatpush1.bf16.msra.mxu0 0
    %487 = vmatprep.subr.bf16.mxu0 0
    %488 = vmatpush1.bf16.msra.mxu0 0
    %489 = vmatprep.subr.bf16.mxu0 0
    %490 = vmatpush1.bf16.msra.mxu0 0
    %491 = vmatprep.subr.bf16.mxu0 0
    %492 = vmatpush1.bf16.msra.mxu0 0
    %493 = vmatprep.subr.bf16.mxu0 0
    %494 = vmatpush1.bf16.msra.mxu0 0
    %495 = vmatprep.subr.bf16.mxu0 0
    %496 = vmatpush1.bf16.msra.mxu0 0
    %497 = vmatprep.subr.bf16.mxu0 0
    %498 = vmatpush1.bf16.msra.mxu0 0
    %499 = vmatprep.mubr.bf16.mxu0 0
    %500 = vmatmul.mubr.bf16.gmra.mrb[0].mxu0 %v465
    %v501 = vpop.f32.mrb[0].mxu0
    %v502 = vadd.f32 0.0, %v501
    %v503 = vpop.f32.mrb[0].mxu0
    %v504 = vadd.f32 0.0, %v503
    %v505 = vpop.f32.mrb[0].mxu0
    %v506 = vadd.f32 0.0, %v505
    %v507 = vpop.f32.mrb[0].mxu0
    %v508 = vadd.f32 0.0, %v507
    %509 = vmatprep.mubr.bf16.mxu0 0
    %510 = vmatmul.mubr.bf16.gmra.mrb[0].mxu0 %v466
    %v511 = vpop.f32.mrb[0].mxu0
    %v512 = vadd.f32 0.0, %v511
    %v513 = vpop.f32.mrb[0].mxu0
    %v514 = vadd.f32 0.0, %v513
    %v515 = vpop.f32.mrb[0].mxu0
    %v516 = vadd.f32 0.0, %v515
    %v517 = vpop.f32.mrb[0].mxu0
    %v518 = vadd.f32 0.0, %v517
    %519 = vdwg.mxu0
    %520 = vmatprep.subr.bf16.mxu0 %v440
    %521 = vmatpush1.bf16.msra.mxu0 %v439
    %522 = vmatprep.subr.bf16.mxu0 %v442
    %523 = vmatpush1.bf16.msra.mxu0 %v441
    %524 = vmatprep.subr.bf16.mxu0 %v444
    %525 = vmatpush1.bf16.msra.mxu0 %v443
    %526 = vmatprep.subr.bf16.mxu0 %v446
    %527 = vmatpush1.bf16.msra.mxu0 %v445
    %528 = vmatprep.subr.bf16.mxu0 %v448
    %529 = vmatpush1.bf16.msra.mxu0 %v447
    %530 = vmatprep.subr.bf16.mxu0 %v450
    %531 = vmatpush1.bf16.msra.mxu0 %v449
    %532 = vmatprep.subr.bf16.mxu0 %v452
    %533 = vmatpush1.bf16.msra.mxu0 %v451
    %534 = vmatprep.subr.bf16.mxu0 %v454
    %535 = vmatpush1.bf16.msra.mxu0 %v453
    %536 = vmatprep.subr.bf16.mxu0 0
    %537 = vmatpush1.bf16.msra.mxu0 0
    %538 = vmatprep.subr.bf16.mxu0 0
    %539 = vmatpush1.bf16.msra.mxu0 0
    %540 = vmatprep.subr.bf16.mxu0 0
    %541 = vmatpush1.bf16.msra.mxu0 0
    %542 = vmatprep.subr.bf16.mxu0 0
    %543 = vmatpush1.bf16.msra.mxu0 0
    %544 = vmatprep.subr.bf16.mxu0 0
    %545 = vmatpush1.bf16.msra.mxu0 0
    %546 = vmatprep.subr.bf16.mxu0 0
    %547 = vmatpush1.bf16.msra.mxu0 0
    %548 = vmatprep.subr.bf16.mxu0 0
    %549 = vmatpush1.bf16.msra.mxu0 0
    %550 = vmatprep.subr.bf16.mxu0 0
    %551 = vmatpush1.bf16.msra.mxu0 0
    %552 = vmatprep.mubr.bf16.mxu0 0
    %553 = vmatmul.mubr.bf16.gmra.mrb[0].mxu0 %v455
    %v554 = vpop.f32.mrb[0].mxu0
    %v555 = vadd.f32 %v502, %v554
    %v556 = vpop.f32.mrb[0].mxu0
    %v557 = vadd.f32 %v504, %v556
    %v558 = vpop.f32.mrb[0].mxu0
    %v559 = vadd.f32 %v506, %v558
    %v560 = vpop.f32.mrb[0].mxu0
    %v561 = vadd.f32 %v508, %v560
    %562 = vmatprep.mubr.bf16.mxu0 0
    %563 = vmatmul.mubr.bf16.gmra.mrb[0].mxu0 %v456
    %v564 = vpop.f32.mrb[0].mxu0
    %v565 = vadd.f32 %v512, %v564
    %v566 = vpop.f32.mrb[0].mxu0
    %v567 = vadd.f32 %v514, %v566
    %v568 = vpop.f32.mrb[0].mxu0
    %v569 = vadd.f32 %v516, %v568
    %v570 = vpop.f32.mrb[0].mxu0
    %v571 = vadd.f32 %v518, %v570
    %572 = vdwg.mxu0
    %v573 = vmul.f32 %v312, %v555
    %v574 = vmul.f32 %v314, %v557
    %v575 = vmul.f32 %v316, %v559
    %v576 = vmul.f32 %v318, %v561
    %v577 = vmul.f32 %v322, %v565
    %v578 = vmul.f32 %v324, %v567
    %v579 = vmul.f32 %v326, %v569
    %v580 = vmul.f32 %v328, %v571
    %v581 = vadd.f32 %v573, %v575
    %v582 = vadd.f32 %v581, %v577
    %v583 = vadd.f32 %v582, %v579
    %v584 = vrot.slane %v583, 4
    %v585 = vadd.f32 %v583, %v584
    %v586 = vrot.slane %v585, 2
    %v587 = vadd.f32 %v585, %v586
    %v588 = vrot.slane %v587, 1
    %v589 = vadd.f32 %v587, %v588
    %v590 = vadd.f32 %v574, %v576
    %v591 = vadd.f32 %v590, %v578
    %v592 = vadd.f32 %v591, %v580
    %v593 = vrot.slane %v592, 4
    %v594 = vadd.f32 %v592, %v593
    %v595 = vrot.slane %v594, 2
    %v596 = vadd.f32 %v594, %v595
    %v597 = vrot.slane %v596, 1
    %v598 = vadd.f32 %v596, %v597
    %v599 = vld [vmem:[#allocation7] sm:$0xff]
    %v600 = vld [vmem:[#allocation7 + $0x8] sm:$0xff]
    %v601 = vld [vmem:[#allocation7 + $0x10] sm:$0xff]
    %v602 = vld [vmem:[#allocation7 + $0x18] sm:$0xff]
    %v603 = vld [vmem:[%s5] sm:$0x3]
    %v604 = vlaneseq
    %v605 = vshrl.u32 %v604, 7
    %v606 = vsub.s32 0, %v605
    %v607 = vrot.slane %v603, %v606
    %v608 = vlaneseq
    %v609 = vshrl.u32 %v608, 7
    %v610 = vsub.s32 1, %v609
    %v611 = vrot.slane %v603, %v610
    %vm612 = vcmp.eq.s32.totalorder %v76, %v607
    %vm613 = vcmp.eq.s32.totalorder %v76, %v611
    %vm614 = vcmp.eq.s32.totalorder %v77, %v607
    %vm615 = vcmp.eq.s32.totalorder %v77, %v611
    %vm616 = vcmp.eq.s32.totalorder %v78, %v607
    %vm617 = vcmp.eq.s32.totalorder %v78, %v611
    %vm618 = vcmp.eq.s32.totalorder %v79, %v607
    %vm619 = vcmp.eq.s32.totalorder %v79, %v611
    %vm620 = vcmp.eq.s32.totalorder %v80, %v607
    %vm621 = vcmp.eq.s32.totalorder %v80, %v611
    %vm622 = vcmp.eq.s32.totalorder %v81, %v607
    %vm623 = vcmp.eq.s32.totalorder %v81, %v611
    %vm624 = vcmp.eq.s32.totalorder %v82, %v607
    %vm625 = vcmp.eq.s32.totalorder %v82, %v611
    %vm626 = vcmp.eq.s32.totalorder %v83, %v607
    %vm627 = vcmp.eq.s32.totalorder %v83, %v611
    %vm628 = vcmp.eq.s32.totalorder %v84, %v607
    %vm629 = vcmp.eq.s32.totalorder %v84, %v611
    %vm630 = vcmp.eq.s32.totalorder %v85, %v607
    %vm631 = vcmp.eq.s32.totalorder %v85, %v611
    %vm632 = vcmp.eq.s32.totalorder %v86, %v607
    %vm633 = vcmp.eq.s32.totalorder %v86, %v611
    %vm634 = vcmp.eq.s32.totalorder %v87, %v607
    %vm635 = vcmp.eq.s32.totalorder %v87, %v611
    %vm636 = vcmp.eq.s32.totalorder %v88, %v607
    %vm637 = vcmp.eq.s32.totalorder %v88, %v611
    %vm638 = vcmp.eq.s32.totalorder %v89, %v607
    %vm639 = vcmp.eq.s32.totalorder %v89, %v611
    %vm640 = vcmp.eq.s32.totalorder %v90, %v607
    %vm641 = vcmp.eq.s32.totalorder %v90, %v611
    %vm642 = vcmp.eq.s32.totalorder %v91, %v607
    %vm643 = vcmp.eq.s32.totalorder %v91, %v611
    %v644 = vsel %vm612, 1, 0
    %v645 = vsel %vm613, 1, 0
    %v646 = vsel %vm614, 1, 0
    %v647 = vsel %vm615, 1, 0
    %v648 = vsel %vm616, 1, 0
    %v649 = vsel %vm617, 1, 0
    %v650 = vsel %vm618, 1, 0
    %v651 = vsel %vm619, 1, 0
    %v652 = vsel %vm620, 1, 0
    %v653 = vsel %vm621, 1, 0
    %v654 = vsel %vm622, 1, 0
    %v655 = vsel %vm623, 1, 0
    %v656 = vsel %vm624, 1, 0
    %v657 = vsel %vm625, 1, 0
    %v658 = vsel %vm626, 1, 0
    %v659 = vsel %vm627, 1, 0
    %v660 = vsel %vm628, 1, 0
    %v661 = vsel %vm629, 1, 0
    %v662 = vsel %vm630, 1, 0
    %v663 = vsel %vm631, 1, 0
    %v664 = vsel %vm632, 1, 0
    %v665 = vsel %vm633, 1, 0
    %v666 = vsel %vm634, 1, 0
    %v667 = vsel %vm635, 1, 0
    %v668 = vsel %vm636, 1, 0
    %v669 = vsel %vm637, 1, 0
    %v670 = vsel %vm638, 1, 0
    %v671 = vsel %vm639, 1, 0
    %v672 = vsel %vm640, 1, 0
    %v673 = vsel %vm641, 1, 0
    %v674 = vsel %vm642, 1, 0
    %v675 = vsel %vm643, 1, 0
    %v676 = vcvt.s32.f32 %v644
    %v677 = vcvt.s32.f32 %v645
    %v678 = vcvt.s32.f32 %v646
    %v679 = vcvt.s32.f32 %v647
    %v680 = vcvt.s32.f32 %v648
    %v681 = vcvt.s32.f32 %v649
    %v682 = vcvt.s32.f32 %v650
    %v683 = vcvt.s32.f32 %v651
    %v684 = vcvt.s32.f32 %v652
    %v685 = vcvt.s32.f32 %v653
    %v686 = vcvt.s32.f32 %v654
    %v687 = vcvt.s32.f32 %v655
    %v688 = vcvt.s32.f32 %v656
    %v689 = vcvt.s32.f32 %v657
    %v690 = vcvt.s32.f32 %v658
    %v691 = vcvt.s32.f32 %v659
    %v692 = vcvt.s32.f32 %v660
    %v693 = vcvt.s32.f32 %v661
    %v694 = vcvt.s32.f32 %v662
    %v695 = vcvt.s32.f32 %v663
    %v696 = vcvt.s32.f32 %v664
    %v697 = vcvt.s32.f32 %v665
    %v698 = vcvt.s32.f32 %v666
    %v699 = vcvt.s32.f32 %v667
    %v700 = vcvt.s32.f32 %v668
    %v701 = vcvt.s32.f32 %v669
    %v702 = vcvt.s32.f32 %v670
    %v703 = vcvt.s32.f32 %v671
    %v704 = vcvt.s32.f32 %v672
    %v705 = vcvt.s32.f32 %v673
    %v706 = vcvt.s32.f32 %v674
    %v707 = vcvt.s32.f32 %v675
    %v708 = vpack.c.bf16 %v678, %v676
    %v709 = vpack.c.bf16 %v679, %v677
    %v710 = vpack.c.bf16 %v682, %v680
    %v711 = vpack.c.bf16 %v683, %v681
    %v712 = vpack.c.bf16 %v686, %v684
    %v713 = vpack.c.bf16 %v687, %v685
    %v714 = vpack.c.bf16 %v690, %v688
    %v715 = vpack.c.bf16 %v691, %v689
    %v716 = vpack.c.bf16 %v694, %v692
    %v717 = vpack.c.bf16 %v695, %v693
    %v718 = vpack.c.bf16 %v698, %v696
    %v719 = vpack.c.bf16 %v699, %v697
    %v720 = vpack.c.bf16 %v702, %v700
    %v721 = vpack.c.bf16 %v703, %v701
    %v722 = vpack.c.bf16 %v706, %v704
    %v723 = vpack.c.bf16 %v707, %v705
    %v724 = vpack.c.bf16 %v600, %v599
    %v725 = vpack.c.bf16 %v602, %v601
    %v726 = vunpack.c.l.bf16 %v724
    %v727 = vunpack.c.h.bf16 %v724
    %v728 = vunpack.c.l.bf16 %v725
    %v729 = vunpack.c.h.bf16 %v725
    %v730 = vsub.f32 %v599, %v726
    %v731 = vsub.f32 %v600, %v727
    %v732 = vsub.f32 %v601, %v728
    %v733 = vsub.f32 %v602, %v729
    %v734 = vpack.c.bf16 %v731, %v730
    %v735 = vpack.c.bf16 %v733, %v732
    %736 = vmatprep.subr.bf16.mxu0 %v709
    %737 = vmatpush1.bf16.msra.mxu0 %v708
    %738 = vmatprep.subr.bf16.mxu0 %v711
    %739 = vmatpush1.bf16.msra.mxu0 %v710
    %740 = vmatprep.subr.bf16.mxu0 %v713
    %741 = vmatpush1.bf16.msra.mxu0 %v712
    %742 = vmatprep.subr.bf16.mxu0 %v715
    %743 = vmatpush1.bf16.msra.mxu0 %v714
    %744 = vmatprep.subr.bf16.mxu0 %v717
    %745 = vmatpush1.bf16.msra.mxu0 %v716
    %746 = vmatprep.subr.bf16.mxu0 %v719
    %747 = vmatpush1.bf16.msra.mxu0 %v718
    %748 = vmatprep.subr.bf16.mxu0 %v721
    %749 = vmatpush1.bf16.msra.mxu0 %v720
    %750 = vmatprep.subr.bf16.mxu0 %v723
    %751 = vmatpush1.bf16.msra.mxu0 %v722
    %752 = vmatprep.subr.bf16.mxu0 0
    %753 = vmatpush1.bf16.msra.mxu0 0
    %754 = vmatprep.subr.bf16.mxu0 0
    %755 = vmatpush1.bf16.msra.mxu0 0
    %756 = vmatprep.subr.bf16.mxu0 0
    %757 = vmatpush1.bf16.msra.mxu0 0
    %758 = vmatprep.subr.bf16.mxu0 0
    %759 = vmatpush1.bf16.msra.mxu0 0
    %760 = vmatprep.subr.bf16.mxu0 0
    %761 = vmatpush1.bf16.msra.mxu0 0
    %762 = vmatprep.subr.bf16.mxu0 0
    %763 = vmatpush1.bf16.msra.mxu0 0
    %764 = vmatprep.subr.bf16.mxu0 0
    %765 = vmatpush1.bf16.msra.mxu0 0
    %766 = vmatprep.subr.bf16.mxu0 0
    %767 = vmatpush1.bf16.msra.mxu0 0
    %768 = vmatprep.mubr.bf16.mxu0 0
    %769 = vmatmul.mubr.bf16.gmra.mrb[0].mxu0 %v734
    %v770 = vpop.f32.mrb[0].mxu0
    %v771 = vadd.f32 0.0, %v770
    %v772 = vpop.f32.mrb[0].mxu0
    %v773 = vadd.f32 0.0, %v772
    %v774 = vpop.f32.mrb[0].mxu0
    %v775 = vadd.f32 0.0, %v774
    %v776 = vpop.f32.mrb[0].mxu0
    %v777 = vadd.f32 0.0, %v776
    %778 = vmatprep.mubr.bf16.mxu0 0
    %779 = vmatmul.mubr.bf16.gmra.mrb[0].mxu0 %v735
    %v780 = vpop.f32.mrb[0].mxu0
    %v781 = vadd.f32 0.0, %v780
    %v782 = vpop.f32.mrb[0].mxu0
    %v783 = vadd.f32 0.0, %v782
    %v784 = vpop.f32.mrb[0].mxu0
    %v785 = vadd.f32 0.0, %v784
    %v786 = vpop.f32.mrb[0].mxu0
    %v787 = vadd.f32 0.0, %v786
    %788 = vdwg.mxu0
    %789 = vmatprep.subr.bf16.mxu0 %v709
    %790 = vmatpush1.bf16.msra.mxu0 %v708
    %791 = vmatprep.subr.bf16.mxu0 %v711
    %792 = vmatpush1.bf16.msra.mxu0 %v710
    %793 = vmatprep.subr.bf16.mxu0 %v713
    %794 = vmatpush1.bf16.msra.mxu0 %v712
    %795 = vmatprep.subr.bf16.mxu0 %v715
    %796 = vmatpush1.bf16.msra.mxu0 %v714
    %797 = vmatprep.subr.bf16.mxu0 %v717
    %798 = vmatpush1.bf16.msra.mxu0 %v716
    %799 = vmatprep.subr.bf16.mxu0 %v719
    %800 = vmatpush1.bf16.msra.mxu0 %v718
    %801 = vmatprep.subr.bf16.mxu0 %v721
    %802 = vmatpush1.bf16.msra.mxu0 %v720
    %803 = vmatprep.subr.bf16.mxu0 %v723
    %804 = vmatpush1.bf16.msra.mxu0 %v722
    %805 = vmatprep.subr.bf16.mxu0 0
    %806 = vmatpush1.bf16.msra.mxu0 0
    %807 = vmatprep.subr.bf16.mxu0 0
    %808 = vmatpush1.bf16.msra.mxu0 0
    %809 = vmatprep.subr.bf16.mxu0 0
    %810 = vmatpush1.bf16.msra.mxu0 0
    %811 = vmatprep.subr.bf16.mxu0 0
    %812 = vmatpush1.bf16.msra.mxu0 0
    %813 = vmatprep.subr.bf16.mxu0 0
    %814 = vmatpush1.bf16.msra.mxu0 0
    %815 = vmatprep.subr.bf16.mxu0 0
    %816 = vmatpush1.bf16.msra.mxu0 0
    %817 = vmatprep.subr.bf16.mxu0 0
    %818 = vmatpush1.bf16.msra.mxu0 0
    %819 = vmatprep.subr.bf16.mxu0 0
    %820 = vmatpush1.bf16.msra.mxu0 0
    %821 = vmatprep.mubr.bf16.mxu0 0
    %822 = vmatmul.mubr.bf16.gmra.mrb[0].mxu0 %v724
    %v823 = vpop.f32.mrb[0].mxu0
    %v824 = vadd.f32 %v771, %v823
    %v825 = vpop.f32.mrb[0].mxu0
    %v826 = vadd.f32 %v773, %v825
    %v827 = vpop.f32.mrb[0].mxu0
    %v828 = vadd.f32 %v775, %v827
    %v829 = vpop.f32.mrb[0].mxu0
    %v830 = vadd.f32 %v777, %v829
    %831 = vmatprep.mubr.bf16.mxu0 0
    %832 = vmatmul.mubr.bf16.gmra.mrb[0].mxu0 %v725
    %v833 = vpop.f32.mrb[0].mxu0
    %v834 = vadd.f32 %v781, %v833
    %v835 = vpop.f32.mrb[0].mxu0
    %v836 = vadd.f32 %v783, %v835
    %v837 = vpop.f32.mrb[0].mxu0
    %v838 = vadd.f32 %v785, %v837
    %v839 = vpop.f32.mrb[0].mxu0
    %v840 = vadd.f32 %v787, %v839
    %841 = vdwg.mxu0
    %v842 = vmul.f32 %v312, %v824
    %v843 = vmul.f32 %v314, %v826
    %v844 = vmul.f32 %v316, %v828
    %v845 = vmul.f32 %v318, %v830
    %v846 = vmul.f32 %v322, %v834
    %v847 = vmul.f32 %v324, %v836
    %v848 = vmul.f32 %v326, %v838
    %v849 = vmul.f32 %v328, %v840
    %v850 = vadd.f32 %v842, %v844
    %v851 = vadd.f32 %v850, %v846
    %v852 = vadd.f32 %v851, %v848
    %v853 = vrot.slane %v852, 4
    %v854 = vadd.f32 %v852, %v853
    %v855 = vrot.slane %v854, 2
    %v856 = vadd.f32 %v854, %v855
    %v857 = vrot.slane %v856, 1
    %v858 = vadd.f32 %v856, %v857
    %v859 = vadd.f32 %v843, %v845
    %v860 = vadd.f32 %v859, %v847
    %v861 = vadd.f32 %v860, %v849
    %v862 = vrot.slane %v861, 4
    %v863 = vadd.f32 %v861, %v862
    %v864 = vrot.slane %v863, 2
    %v865 = vadd.f32 %v863, %v864
    %v866 = vrot.slane %v865, 1
    %v867 = vadd.f32 %v865, %v866
    %v870 = vcombine.low %v589, %v598
    %v872 = vunpack.c.l.s4 1966171168
    %v873 = vunpack.c.0.s8 %v872
    %v874 = vlaneseq
    %v875 = vshrl.u32 %v874, 7
    %v876 = vsub.s32 %v873, %v875
    %v877 = vrot.slane %v870, %v876
    %v879 = vunpack.c.l.s4 1966171168
    %v880 = vunpack.c.0.s8 %v879
    %v881 = vlaneseq
    %v882 = vshrl.u32 %v881, 7
    %v883 = vsub.s32 %v880, %v882
    %v884 = vrot.slane %v877, %v883
    %v886 = vmul.f32 %v69, %v884
    %v887 = vsub.f32 1.0, %v69
    %v890 = vcombine.low %v858, %v867
    %v892 = vunpack.c.l.s4 1966171168
    %v893 = vunpack.c.0.s8 %v892
    %v894 = vlaneseq
    %v895 = vshrl.u32 %v894, 7
    %v896 = vsub.s32 %v893, %v895
    %v897 = vrot.slane %v890, %v896
    %v899 = vunpack.c.l.s4 1966171168
    %v900 = vunpack.c.0.s8 %v899
    %v901 = vlaneseq
    %v902 = vshrl.u32 %v901, 7
    %v903 = vsub.s32 %v900, %v902
    %v904 = vrot.slane %v897, %v903
    %v906 = vmul.f32 %v887, %v904
    %v907 = vadd.f32 %v886, %v906
    %v908 = vlaneseq
    %vm909 = vcmp.ge.s32.totalorder %v908, 0
    %vm910 = vcmp.lt.s32.totalorder %v908, 256
    %vm911 = vmand %vm909, %vm910
    %912 = vst.msk [vmem:[#allocation8] sm:$0x3] %vm911, %v907
    // Predicated region
    $region42: #{tpu_custom_call.1} parent=1 // pred_check
      _
    $region43: #{tpu_custom_call.1} parent=1 // pred_check_branch
      %914 = sbr.rel (0) target = $region45
    $region44: #{tpu_custom_call.1} parent=1 // pred_region
      %s916 = ssub.s32 32, 32
      %917 = vsyncadd [#allocation4], %s916
      %s919 = sshll.u32 [#allocation8], 4
      %s920 = int_to_ptr.vmem [resolvable:$true] %s919
      %922 = dma.vmem_to_hbm [thread:$0]  %s920, 32, %s7, [#allocation4]
    $region45: #{tpu_custom_call.1} parent=1 // pred_fallthru
      _
    // Predicated region
    $region46: #{tpu_custom_call.1} parent=1 // pred_check
      _
    $region47: #{tpu_custom_call.1} parent=1 // pred_check_branch
      %924 = sbr.rel (0) target = $region49
    $region48: #{tpu_custom_call.1} parent=1 // pred_region
      %925 = dma.done [#allocation4], 32
    $region49: #{tpu_custom_call.1} parent=1 // pred_fallthru
      _
    %926 = vsyncpa [#allocation3], 1
    %927 = vsyncpa [#allocation6], 1
    %928 = vsyncpa [#allocation4], 1

</llo_original>
